<compile_context>
chip_gen: v6e
topology: v6e:2x2x1
jax: 0.10.0
libtpu: 0.0.40
codegen_flags: <defaults>
</compile_context>

<pallas_src>
import jax
import jax.numpy as jnp
from jax.experimental import pallas as pl
from jax.experimental.pallas import tpu as pltpu


def chessnet_kernel(x_ref, w1_ref, b1_ref, w2_ref, b2_ref, w3_ref, b3_ref, o_ref):
    x = x_ref[...]                                                 # (TB, 64) compute dtype

    # fc1 + ReLU : (TB, 64) @ (64, 128) -> (TB, 128), f32 accumulate on the MXU.
    h1 = jnp.dot(x, w1_ref[...], preferred_element_type=jnp.float32) + b1_ref[...]
    h1 = jnp.maximum(h1, 0.0)

    # fc2 + ReLU : (TB, 128) @ (128, 64) -> (TB, 64), f32 accumulate on the MXU.
    h2 = jnp.dot(h1.astype(w2_ref.dtype), w2_ref[...],
                 preferred_element_type=jnp.float32) + b2_ref[...]
    h2 = jnp.maximum(h2, 0.0)

    # fc3 : single output column.  Done on the VPU (elementwise mul) + XLU lane
    # reduce with keepdims, writing a (TB, 1) f32 block.
    w3_row = w3_ref[...].astype(jnp.float32)                       # (1, 64)
    y = jnp.sum(h2 * w3_row, axis=-1, keepdims=True) + b3_ref[0]   # (TB, 1) f32
    o_ref[...] = y


def chessnet_forward(x, params, *, block_rows=1024, compute_dtype=jnp.bfloat16):
    """x: (B, 64).  Returns (B,) float32 (matches torch `self.fc3(x).squeeze()`).

    block_rows: batch-tile size.  Must be a multiple of 128; 512-2048 fills the
    MXU M dimension nicely.  Per-tile VMEM is tiny (2 buffers x TB x 64 x 2B
    plus ~35 KiB of resident weights) -> well inside scoped-VMEM defaults on
    v5e / v6e / v7x.
    """
    w1, b1, w2, b2, w3, b3 = params
    B = x.shape[0]
    TB = int(block_rows)
    assert TB % 128 == 0, "block_rows must be a multiple of 128"

    num_tiles = pl.cdiv(B, TB)
    B_pad = num_tiles * TB
    if B_pad != B:
        # Tiled specs need full tiles; pad with zeros and slice the output back.
        x = jnp.pad(x, ((0, B_pad - B), (0, 0)))

    # bf16 inputs halve HBM traffic; f32 accumulation is preserved inside the kernel.
    x_c = x.astype(compute_dtype)
    w1_c = w1.astype(compute_dtype)
    w2_c = w2.astype(compute_dtype)
    w3_row = jnp.reshape(w3, (1, 64)).astype(compute_dtype)   # row layout: no in-kernel relayout
    b1_f = jnp.reshape(b1, (1, 128)).astype(jnp.float32)
    b2_f = jnp.reshape(b2, (1, 64)).astype(jnp.float32)
    b3_s = jnp.reshape(b3, (1,)).astype(jnp.float32)          # scalar -> SMEM

    def const_spec(shape):
        # Whole (tiny) array, same block every grid step -> stays VMEM resident.
        return pl.BlockSpec(shape, lambda i: (0, 0))

    out = pl.pallas_call(
        chessnet_kernel,
        out_shape=jax.ShapeDtypeStruct((B_pad, 1), jnp.float32),
        grid=(num_tiles,),
        in_specs=[
            pl.BlockSpec((TB, 64), lambda i: (i, 0)),               # x: batch-tiled, double-buffered
            const_spec((64, 128)),                                  # w1
            const_spec((1, 128)),                                   # b1
            const_spec((128, 64)),                                  # w2
            const_spec((1, 64)),                                    # b2
            const_spec((1, 64)),                                    # w3 (as a row)
            pl.BlockSpec(memory_space=pltpu.MemorySpace.SMEM),      # b3 scalar
        ],
        out_specs=pl.BlockSpec((TB, 1), lambda i: (i, 0)),
        compiler_params=pltpu.CompilerParams(
            dimension_semantics=("parallel",),                      # megacore split on v7x
        ),
    )(x_c, w1_c, b1_f, w2_c, b2_f, w3_row, b3_s)

    return out[:B, 0]


def init_params(key):
    """nn.Linear-style init; weights stored (in_features, out_features)."""
    def linear(key, fan_in, fan_out):
        kw, kb = jax.random.split(key)
        bound = 1.0 / jnp.sqrt(fan_in)
        w = jax.random.uniform(kw, (fan_in, fan_out), jnp.float32, -bound, bound)
        b = jax.random.uniform(kb, (1, fan_out), jnp.float32, -bound, bound)
        return w, b

    k1, k2, k3 = jax.random.split(key, 3)
    w1, b1 = linear(k1, 64, 128)
    w2, b2 = linear(k2, 128, 64)
    w3, b3 = linear(k3, 64, 1)
    return (w1, b1, w2, b2, w3, b3)


def reference_forward(x, params, compute_dtype=jnp.float32):
    """Pure-JAX reference mirroring the kernel's dtype strategy.

    compute_dtype=float32 matches the PyTorch forward; bfloat16 mirrors the
    bf16-input / f32-accumulate kernel for an apples-to-apples check.
    """
    w1, b1, w2, b2, w3, b3 = params
    f32 = jnp.float32
    h1 = jnp.dot(x.astype(compute_dtype), w1.astype(compute_dtype),
                 preferred_element_type=f32) + b1
    h1 = jnp.maximum(h1, 0.0)
    h2 = jnp.dot(h1.astype(compute_dtype), w2.astype(compute_dtype),
                 preferred_element_type=f32) + b2
    h2 = jnp.maximum(h2, 0.0)
    y = jnp.dot(h2, w3.astype(compute_dtype).astype(f32),
                preferred_element_type=f32) + b3
    return jnp.squeeze(y, axis=-1)


if __name__ == "__main__":
    key = jax.random.PRNGKey(0)
    k_params, k_x = jax.random.split(key)

    params = init_params(k_params)

    # Small but multi-tile + non-multiple batch, so the grid and padding paths
    # are exercised.  (In production, batch many positions per call: per-launch
    # overhead dwarfs the ~33 KFLOP/row of compute below a few thousand rows.)
    B = 300
    x = jax.random.normal(k_x, (B, 64), dtype=jnp.float32)

    # bf16 fast path (default) vs bf16-mirrored reference.
    y_bf16 = jax.block_until_ready(
        chessnet_forward(x, params, block_rows=128, compute_dtype=jnp.bfloat16))
    y_ref_bf16 = reference_forward(x, params, compute_dtype=jnp.bfloat16)
    assert y_bf16.shape == (B,), y_bf16.shape
    assert jnp.allclose(y_bf16, y_ref_bf16, atol=5e-2, rtol=5e-2), "bf16 path mismatch"

    # f32 path vs the exact PyTorch-equivalent reference.
    # (Tolerance covers TPU default matmul precision / accumulation-order diffs.)
    y_f32 = jax.block_until_ready(
        chessnet_forward(x, params, block_rows=256, compute_dtype=jnp.float32))
    y_ref_f32 = reference_forward(x, params, compute_dtype=jnp.float32)
    assert y_f32.shape == (B,), y_f32.shape
    assert jnp.allclose(y_f32, y_ref_f32, atol=2e-2, rtol=2e-2), "f32 path mismatch"

    print("KERNEL_OK")
</pallas_src>

<mosaic_0001>
module attributes {stable_mosaic.version = 11 : i64} {
  func.func @chessnet_kernel(%arg0: i32, %arg1: memref<128x64xbf16, #tpu.memory_space<vmem>>, %arg2: memref<64x128xbf16, #tpu.memory_space<vmem>>, %arg3: memref<1x128xf32, #tpu.memory_space<vmem>>, %arg4: memref<128x64xbf16, #tpu.memory_space<vmem>>, %arg5: memref<1x64xf32, #tpu.memory_space<vmem>>, %arg6: memref<1x64xbf16, #tpu.memory_space<vmem>>, %arg7: memref<1xf32, #tpu.memory_space<smem>>, %arg8: memref<128x1xf32, #tpu.memory_space<vmem>>) attributes {dimension_semantics = [#tpu.dimension_semantics<parallel>], iteration_bounds = array<i64: 3>, scalar_prefetch = 0 : i64, scratch_operands = 0 : i64, tpu.core_type = #tpu.core_type<tc>, window_params = [{transform_indices = @transform_0, window_bounds = array<i64: 128, 64>}, {pipeline_mode = #tpu.pipeline_mode<synchronous>, transform_indices = @transform_1, window_bounds = array<i64: 64, 128>}, {pipeline_mode = #tpu.pipeline_mode<synchronous>, transform_indices = @transform_2, window_bounds = array<i64: 1, 128>}, {pipeline_mode = #tpu.pipeline_mode<synchronous>, transform_indices = @transform_3, window_bounds = array<i64: 128, 64>}, {pipeline_mode = #tpu.pipeline_mode<synchronous>, transform_indices = @transform_4, window_bounds = array<i64: 1, 64>}, {pipeline_mode = #tpu.pipeline_mode<synchronous>, transform_indices = @transform_5, window_bounds = array<i64: 1, 64>}, {transform_indices = @transform_6, window_bounds = array<i64: 1>}, {transform_indices = @transform_7, window_bounds = array<i64: 128, 1>}]} {
    %c0 = arith.constant 0 : index
    %c0_0 = arith.constant 0 : index
    %0 = vector.load %arg1[%c0, %c0_0] : memref<128x64xbf16, #tpu.memory_space<vmem>>, vector<128x64xbf16>
    %c0_1 = arith.constant 0 : index
    %c0_2 = arith.constant 0 : index
    %1 = vector.load %arg2[%c0_1, %c0_2] : memref<64x128xbf16, #tpu.memory_space<vmem>>, vector<64x128xbf16>
    %cst = arith.constant dense<0.000000e+00> : vector<128x128xf32>
    %2 = tpu.matmul %0, %1, %cst {dimension_numbers = #tpu.dot_dimension_numbers<[1], [0], [0], [1], [0, 0, 1, 1], [], []>} : vector<128x64xbf16>, vector<64x128xbf16>, vector<128x128xf32> -> vector<128x128xf32>
    %c0_3 = arith.constant 0 : index
    %c0_4 = arith.constant 0 : index
    %3 = vector.load %arg3[%c0_3, %c0_4] : memref<1x128xf32, #tpu.memory_space<vmem>>, vector<1x128xf32>
    %4 = vector.broadcast %3 : vector<1x128xf32> to vector<128x128xf32>
    %5 = arith.addf %2, %4 : vector<128x128xf32>
    %cst_5 = arith.constant 0.000000e+00 : f32
    %6 = vector.broadcast %cst_5 : f32 to vector<128x128xf32>
    %7 = arith.maximumf %5, %6 : vector<128x128xf32>
    %8 = arith.truncf %7 : vector<128x128xf32> to vector<128x128xbf16>
    %c0_6 = arith.constant 0 : index
    %c0_7 = arith.constant 0 : index
    %9 = vector.load %arg4[%c0_6, %c0_7] : memref<128x64xbf16, #tpu.memory_space<vmem>>, vector<128x64xbf16>
    %cst_8 = arith.constant dense<0.000000e+00> : vector<128x64xf32>
    %10 = tpu.matmul %8, %9, %cst_8 {dimension_numbers = #tpu.dot_dimension_numbers<[1], [0], [0], [1], [0, 0, 1, 1], [], []>} : vector<128x128xbf16>, vector<128x64xbf16>, vector<128x64xf32> -> vector<128x64xf32>
    %c0_9 = arith.constant 0 : index
    %c0_10 = arith.constant 0 : index
    %11 = vector.load %arg5[%c0_9, %c0_10] : memref<1x64xf32, #tpu.memory_space<vmem>>, vector<1x64xf32>
    %12 = vector.broadcast %11 : vector<1x64xf32> to vector<128x64xf32>
    %13 = arith.addf %10, %12 : vector<128x64xf32>
    %cst_11 = arith.constant 0.000000e+00 : f32
    %14 = vector.broadcast %cst_11 : f32 to vector<128x64xf32>
    %15 = arith.maximumf %13, %14 : vector<128x64xf32>
    %c0_12 = arith.constant 0 : index
    %c0_13 = arith.constant 0 : index
    %16 = vector.load %arg6[%c0_12, %c0_13] : memref<1x64xbf16, #tpu.memory_space<vmem>>, vector<1x64xbf16>
    %17 = arith.extf %16 : vector<1x64xbf16> to vector<1x64xf32>
    %18 = vector.broadcast %17 : vector<1x64xf32> to vector<128x64xf32>
    %19 = arith.mulf %15, %18 : vector<128x64xf32>
    %cst_14 = arith.constant dense<0.000000e+00> : vector<128xf32>
    %20 = vector.multi_reduction <add>, %19, %cst_14 [1] : vector<128x64xf32> to vector<128xf32>
    %21 = vector.shape_cast %20 : vector<128xf32> to vector<128x1xf32>
    %c0_15 = arith.constant 0 : index
    %22 = memref.load %arg7[%c0_15] : memref<1xf32, #tpu.memory_space<smem>>
    %23 = vector.broadcast %22 : f32 to vector<128x1xf32>
    %24 = arith.addf %21, %23 : vector<128x1xf32>
    %c0_16 = arith.constant 0 : index
    %c0_17 = arith.constant 0 : index
    %25 = vector.load %arg8[%c0_16, %c0_17] : memref<128x1xf32, #tpu.memory_space<vmem>>, vector<128x1xf32>
    tpu.vector_store %arg8[%c0_16, %c0_17], %24 {strides = array<i32>} : memref<128x1xf32, #tpu.memory_space<vmem>>, vector<128x1xf32>,
    return
  }
  func.func @transform_0(%arg0: i32) -> (i32, i32) {
    %c0_i32 = arith.constant 0 : i32
    %c0_i32_0 = arith.constant 0 : i32
    return %arg0, %c0_i32 : i32, i32
  }
  func.func @transform_1(%arg0: i32) -> (i32, i32) {
    %c0_i32 = arith.constant 0 : i32
    %c0_i32_0 = arith.constant 0 : i32
    %c0_i32_1 = arith.constant 0 : i32
    return %c0_i32, %c0_i32_0 : i32, i32
  }
  func.func @transform_2(%arg0: i32) -> (i32, i32) {
    %c0_i32 = arith.constant 0 : i32
    %c0_i32_0 = arith.constant 0 : i32
    %c0_i32_1 = arith.constant 0 : i32
    return %c0_i32, %c0_i32_0 : i32, i32
  }
  func.func @transform_3(%arg0: i32) -> (i32, i32) {
    %c0_i32 = arith.constant 0 : i32
    %c0_i32_0 = arith.constant 0 : i32
    %c0_i32_1 = arith.constant 0 : i32
    return %c0_i32, %c0_i32_0 : i32, i32
  }
  func.func @transform_4(%arg0: i32) -> (i32, i32) {
    %c0_i32 = arith.constant 0 : i32
    %c0_i32_0 = arith.constant 0 : i32
    %c0_i32_1 = arith.constant 0 : i32
    return %c0_i32, %c0_i32_0 : i32, i32
  }
  func.func @transform_5(%arg0: i32) -> (i32, i32) {
    %c0_i32 = arith.constant 0 : i32
    %c0_i32_0 = arith.constant 0 : i32
    %c0_i32_1 = arith.constant 0 : i32
    return %c0_i32, %c0_i32_0 : i32, i32
  }
  func.func @transform_6(%arg0: i32) -> i32 {
    %c0_i32 = arith.constant 0 : i32
    %c0_i32_0 = arith.constant 0 : i32
    return %c0_i32 : i32
  }
  func.func @transform_7(%arg0: i32) -> (i32, i32) {
    %c0_i32 = arith.constant 0 : i32
    %c0_i32_0 = arith.constant 0 : i32
    return %arg0, %c0_i32 : i32, i32
  }
}

</mosaic_0001>

<llo_original>
// kernel: tpu_custom_call.1
$region0: #{tpu_custom_call.1}
  #allocation0 [shape = 'u32[]', space=smem, size = 0x4, offset = 0x4, fixed_abs, tag = 'smem constant byte address 0x4 - core index']
  #allocation1 [shape = 'u32[144,128]{1,0:T(1,128)}', space=vmem, size = 0x12000, scoped, tag = 'internal scratch']
  #allocation2 [shape = 'f32[1]{0:T(128)S(6)}', space=smem, size = 0x200, scoped, tag = 'scoped memory for tpu_custom_call.1']
  %s0 = inlined_call_operand.vmem [shape: bf16[384,64], index: 0, kind: input, shape index: {}]
  %s1 = inlined_call_operand.vmem [shape: bf16[64,128], index: 1, kind: input, shape index: {}]
  %s2 = inlined_call_operand.vmem [shape: f32[1,128], index: 2, kind: input, shape index: {}]
  %s3 = inlined_call_operand.vmem [shape: bf16[128,64], index: 3, kind: input, shape index: {}]
  %s4 = inlined_call_operand.vmem [shape: f32[1,64], index: 4, kind: input, shape index: {}]
  %s5 = inlined_call_operand.vmem [shape: bf16[1,64], index: 5, kind: input, shape index: {}]
  %s6 = inlined_call_operand.<no memory space> [shape: f32[1], index: 6, kind: input, shape index: {}]
  %s7 = inlined_call_operand.vmem [shape: f32[384,1], index: 7, kind: output, shape index: {}]
  %s8 = sld [smem:[#allocation0]]
  $region61: #{tpu_custom_call.1} parent=0
    _
  %s10 = ssub.s32 1, %s8
  %s11 = scalar_select 0, %s10, %s8
  %12 = sst [smem:[#allocation2]] %s6
  loop: start=0, step=1, limit=5
  $region2: #{tpu_custom_call.1} parent=0 // loop_pre_header
    _
  $region3: #{tpu_custom_call.1} parent=0 // loop_header
    %s14 = sphi 0, %s18
    %p15 = scmp.ge.s32.totalorder %s14, 5
    %s24 = sphi 0, %s26
    %s27 = sphi 0, %s24
    %s28 = sphi 0, %s27
    %s44 = sphi 0, %s28
    %s48 = sphi 0, %s48
    %s50 = sphi 0, %s48
    %s51 = sphi 0, %s50
    %s65 = sphi 0, %s51
    %s69 = sphi 0, %s69
    %s71 = sphi 0, %s69
    %s72 = sphi 0, %s71
    %s86 = sphi 0, %s72
    %s90 = sphi 0, %s90
    %s92 = sphi 0, %s90
    %s93 = sphi 0, %s92
    %s107 = sphi 0, %s93
    %s111 = sphi 0, %s111
    %s113 = sphi 0, %s111
    %s114 = sphi 0, %s113
    %s128 = sphi 0, %s114
    %s132 = sphi 0, %s132
    %s134 = sphi 0, %s132
    %s135 = sphi 0, %s134
    %s149 = sphi 0, %s135
    %s153 = sphi 0, %s153
    %s155 = sphi 0, %s153
    %s156 = sphi 0, %s155
    %s170 = sphi 0, %s156
    %s176 = sphi 0, %s178
    %s179 = sphi 0, %s176
    %s180 = sphi 0, %s179
    %s196 = sphi 0, %s180
  $region4: #{tpu_custom_call.1} parent=0 // loop_header_branch
    %17 = sbr.rel (%p15) target = $region8
  $region5: #{tpu_custom_call.1} parent=0 // loop_body
    %s19 = ssub.s32 %s14, 1
    %s20 = ssub.s32 %s14, 2
    %s21 = sadd.s32 %s14, 1
    %s22 = ssub.s32 %s14, %s21
    %p23 = scmp.eq.s32.totalorder %s22, 0
    %s25 = sadd.s32 %s24, 1
    %s26 = scalar_select %p23, %s24, %s25
    %p29 = pneg %p23
    %p30 = scmp.eq.s32.totalorder %s14, 2
    %p31 = por %p29, %p30
    %p32 = scmp.ne.s32.totalorder %s24, %s27
    %p33 = scmp.eq.s32.totalorder %s14, 0
    %p34 = por %p32, %p33
    %p35 = scmp.ne.s32.totalorder %s24, %s27
    %p36 = scmp.eq.s32.totalorder %s19, 2
    %p37 = por %p35, %p36
    %p38 = scmp.ne.s32.totalorder %s27, %s28
    %p39 = scmp.eq.s32.totalorder %s19, 0
    %p40 = por %p38, %p39
    %p41 = scmp.ne.s32.totalorder %s27, %s28
    %p42 = scmp.eq.s32.totalorder %s20, 2
    %p43 = por %p41, %p42
    %p45 = scmp.ne.s32.totalorder %s28, %s44
    %p46 = scmp.eq.s32.totalorder %s20, 0
    %p47 = por %p45, %p46
    %s49 = sadd.s32 %s48, 1
    %p52 = scmp.eq.s32.totalorder %s14, 2
    %p53 = scmp.ne.s32.totalorder %s48, %s50
    %p54 = scmp.eq.s32.totalorder %s14, 0
    %p55 = por %p53, %p54
    %p56 = scmp.ne.s32.totalorder %s48, %s50
    %p57 = scmp.eq.s32.totalorder %s19, 2
    %p58 = por %p56, %p57
    %p59 = scmp.ne.s32.totalorder %s50, %s51
    %p60 = scmp.eq.s32.totalorder %s19, 0
    %p61 = por %p59, %p60
    %p62 = scmp.ne.s32.totalorder %s50, %s51
    %p63 = scmp.eq.s32.totalorder %s20, 2
    %p64 = por %p62, %p63
    %p66 = scmp.ne.s32.totalorder %s51, %s65
    %p67 = scmp.eq.s32.totalorder %s20, 0
    %p68 = por %p66, %p67
    %s70 = sadd.s32 %s69, 1
    %p73 = scmp.eq.s32.totalorder %s14, 2
    %p74 = scmp.ne.s32.totalorder %s69, %s71
    %p75 = scmp.eq.s32.totalorder %s14, 0
    %p76 = por %p74, %p75
    %p77 = scmp.ne.s32.totalorder %s69, %s71
    %p78 = scmp.eq.s32.totalorder %s19, 2
    %p79 = por %p77, %p78
    %p80 = scmp.ne.s32.totalorder %s71, %s72
    %p81 = scmp.eq.s32.totalorder %s19, 0
    %p82 = por %p80, %p81
    %p83 = scmp.ne.s32.totalorder %s71, %s72
    %p84 = scmp.eq.s32.totalorder %s20, 2
    %p85 = por %p83, %p84
    %p87 = scmp.ne.s32.totalorder %s72, %s86
    %p88 = scmp.eq.s32.totalorder %s20, 0
    %p89 = por %p87, %p88
    %s91 = sadd.s32 %s90, 1
    %p94 = scmp.eq.s32.totalorder %s14, 2
    %p95 = scmp.ne.s32.totalorder %s90, %s92
    %p96 = scmp.eq.s32.totalorder %s14, 0
    %p97 = por %p95, %p96
    %p98 = scmp.ne.s32.totalorder %s90, %s92
    %p99 = scmp.eq.s32.totalorder %s19, 2
    %p100 = por %p98, %p99
    %p101 = scmp.ne.s32.totalorder %s92, %s93
    %p102 = scmp.eq.s32.totalorder %s19, 0
    %p103 = por %p101, %p102
    %p104 = scmp.ne.s32.totalorder %s92, %s93
    %p105 = scmp.eq.s32.totalorder %s20, 2
    %p106 = por %p104, %p105
    %p108 = scmp.ne.s32.totalorder %s93, %s107
    %p109 = scmp.eq.s32.totalorder %s20, 0
    %p110 = por %p108, %p109
    %s112 = sadd.s32 %s111, 1
    %p115 = scmp.eq.s32.totalorder %s14, 2
    %p116 = scmp.ne.s32.totalorder %s111, %s113
    %p117 = scmp.eq.s32.totalorder %s14, 0
    %p118 = por %p116, %p117
    %p119 = scmp.ne.s32.totalorder %s111, %s113
    %p120 = scmp.eq.s32.totalorder %s19, 2
    %p121 = por %p119, %p120
    %p122 = scmp.ne.s32.totalorder %s113, %s114
    %p123 = scmp.eq.s32.totalorder %s19, 0
    %p124 = por %p122, %p123
    %p125 = scmp.ne.s32.totalorder %s113, %s114
    %p126 = scmp.eq.s32.totalorder %s20, 2
    %p127 = por %p125, %p126
    %p129 = scmp.ne.s32.totalorder %s114, %s128
    %p130 = scmp.eq.s32.totalorder %s20, 0
    %p131 = por %p129, %p130
    %s133 = sadd.s32 %s132, 1
    %p136 = scmp.eq.s32.totalorder %s14, 2
    %p137 = scmp.ne.s32.totalorder %s132, %s134
    %p138 = scmp.eq.s32.totalorder %s14, 0
    %p139 = por %p137, %p138
    %p140 = scmp.ne.s32.totalorder %s132, %s134
    %p141 = scmp.eq.s32.totalorder %s19, 2
    %p142 = por %p140, %p141
    %p143 = scmp.ne.s32.totalorder %s134, %s135
    %p144 = scmp.eq.s32.totalorder %s19, 0
    %p145 = por %p143, %p144
    %p146 = scmp.ne.s32.totalorder %s134, %s135
    %p147 = scmp.eq.s32.totalorder %s20, 2
    %p148 = por %p146, %p147
    %p150 = scmp.ne.s32.totalorder %s135, %s149
    %p151 = scmp.eq.s32.totalorder %s20, 0
    %p152 = por %p150, %p151
    %s154 = sadd.s32 %s153, 1
    %p157 = scmp.eq.s32.totalorder %s14, 2
    %p158 = scmp.ne.s32.totalorder %s153, %s155
    %p159 = scmp.eq.s32.totalorder %s14, 0
    %p160 = por %p158, %p159
    %p161 = scmp.ne.s32.totalorder %s153, %s155
    %p162 = scmp.eq.s32.totalorder %s19, 2
    %p163 = por %p161, %p162
    %p164 = scmp.ne.s32.totalorder %s155, %s156
    %p165 = scmp.eq.s32.totalorder %s19, 0
    %p166 = por %p164, %p165
    %p167 = scmp.ne.s32.totalorder %s155, %s156
    %p168 = scmp.eq.s32.totalorder %s20, 2
    %p169 = por %p167, %p168
    %p171 = scmp.ne.s32.totalorder %s156, %s170
    %p172 = scmp.eq.s32.totalorder %s20, 0
    %p173 = por %p171, %p172
    %s174 = ssub.s32 %s14, %s21
    %p175 = scmp.eq.s32.totalorder %s174, 0
    %s177 = sadd.s32 %s176, 1
    %s178 = scalar_select %p175, %s176, %s177
    %p181 = pneg %p175
    %p182 = scmp.eq.s32.totalorder %s14, 2
    %p183 = por %p181, %p182
    %p184 = scmp.ne.s32.totalorder %s176, %s179
    %p185 = scmp.eq.s32.totalorder %s14, 0
    %p186 = por %p184, %p185
    %p187 = scmp.ne.s32.totalorder %s176, %s179
    %p188 = scmp.eq.s32.totalorder %s19, 2
    %p189 = por %p187, %p188
    %p190 = scmp.ne.s32.totalorder %s179, %s180
    %p191 = scmp.eq.s32.totalorder %s19, 0
    %p192 = por %p190, %p191
    %p193 = scmp.ne.s32.totalorder %s179, %s180
    %p194 = scmp.eq.s32.totalorder %s20, 2
    %p195 = por %p193, %p194
    %p197 = scmp.ne.s32.totalorder %s180, %s196
    %p198 = scmp.eq.s32.totalorder %s20, 0
    %p199 = por %p197, %p198
    %p200 = scmp.le.s32.totalorder 1, %s14
    %p201 = scmp.lt.s32.totalorder %s14, 4
    %p202 = pnand %p200, %p201
    %p203 = pneg %p202
    // Predicated region
    $region9: #{tpu_custom_call.1} parent=5 // pred_check
      _
    $region10: #{tpu_custom_call.1} parent=5 // pred_check_branch
      %205 = sbr.rel (%p202) target = $region12
    $region11: #{tpu_custom_call.1} parent=5 // pred_region
      %s206 = ssub.s32 %s14, 1
      // Predicated region
      $region13: #{tpu_custom_call.1} parent=11 // pred_check
        %p207 = pneg %p61
      $region14: #{tpu_custom_call.1} parent=11 // pred_check_branch
        %209 = sbr.rel (%p207) target = $region16
      $region15: #{tpu_custom_call.1} parent=11 // pred_region
        _
      $region16: #{tpu_custom_call.1} parent=11 // pred_fallthru
        _
      // Predicated region
      $region17: #{tpu_custom_call.1} parent=11 // pred_check
        %p210 = pneg %p82
      $region18: #{tpu_custom_call.1} parent=11 // pred_check_branch
        %212 = sbr.rel (%p210) target = $region20
      $region19: #{tpu_custom_call.1} parent=11 // pred_region
        _
      $region20: #{tpu_custom_call.1} parent=11 // pred_fallthru
        _
      // Predicated region
      $region21: #{tpu_custom_call.1} parent=11 // pred_check
        %p213 = pneg %p103
      $region22: #{tpu_custom_call.1} parent=11 // pred_check_branch
        %215 = sbr.rel (%p213) target = $region24
      $region23: #{tpu_custom_call.1} parent=11 // pred_region
        _
      $region24: #{tpu_custom_call.1} parent=11 // pred_fallthru
        _
      // Predicated region
      $region25: #{tpu_custom_call.1} parent=11 // pred_check
        %p216 = pneg %p124
      $region26: #{tpu_custom_call.1} parent=11 // pred_check_branch
        %218 = sbr.rel (%p216) target = $region28
      $region27: #{tpu_custom_call.1} parent=11 // pred_region
        _
      $region28: #{tpu_custom_call.1} parent=11 // pred_fallthru
        _
      // Predicated region
      $region29: #{tpu_custom_call.1} parent=11 // pred_check
        %p219 = pneg %p145
      $region30: #{tpu_custom_call.1} parent=11 // pred_check_branch
        %221 = sbr.rel (%p219) target = $region32
      $region31: #{tpu_custom_call.1} parent=11 // pred_region
        _
      $region32: #{tpu_custom_call.1} parent=11 // pred_fallthru
        _
      // Predicated region
      $region33: #{tpu_custom_call.1} parent=11 // pred_check
        %p222 = pneg %p166
      $region34: #{tpu_custom_call.1} parent=11 // pred_check_branch
        %224 = sbr.rel (%p222) target = $region36
      $region35: #{tpu_custom_call.1} parent=11 // pred_region
        _
      $region36: #{tpu_custom_call.1} parent=11 // pred_fallthru
        _
    $region12: #{tpu_custom_call.1} parent=5 // pred_fallthru
      _
    %p225 = scmp.lt.s32.totalorder %s14, 3
    // Predicated region
    $region37: #{tpu_custom_call.1} parent=5 // pred_check
      %p226 = pneg %p225
    $region38: #{tpu_custom_call.1} parent=5 // pred_check_branch
      %228 = sbr.rel (%p226) target = $region40
    $region39: #{tpu_custom_call.1} parent=5 // pred_region
      // Predicated region
      $region41: #{tpu_custom_call.1} parent=39 // pred_check
        %p229 = pneg %p34
      $region42: #{tpu_custom_call.1} parent=39 // pred_check_branch
        %231 = sbr.rel (%p229) target = $region44
      $region43: #{tpu_custom_call.1} parent=39 // pred_region
        %s232 = smul.u32 16, %s14
        %p233 = scmp.lt.s32.totalorder %s232, 47
        %s234 = scalar_select %p233, %s232, 47
        %s235 = smul.addr %s234, 4
        %s236 = scalar_lea.vmem %s0, %s235
        %s237 = smul.u32 16, %s14
      $region44: #{tpu_custom_call.1} parent=39 // pred_fallthru
        _
    $region40: #{tpu_custom_call.1} parent=5 // pred_fallthru
      _
    %p238 = scmp.le.s32.totalorder 1, %s14
    %p239 = scmp.lt.s32.totalorder %s14, 4
    %p240 = pnand %p238, %p239
    %p241 = pneg %p240
    // Predicated region
    $region45: #{tpu_custom_call.1} parent=5 // pred_check
      _
    $region46: #{tpu_custom_call.1} parent=5 // pred_check_branch
      %243 = sbr.rel (%p240) target = $region48
    $region47: #{tpu_custom_call.1} parent=5 // pred_region
      %s244 = ssub.s32 %s14, 1
      %s245 = smul.u32 16, %s19
      %p246 = scmp.lt.s32.totalorder %s245, 47
      %s247 = scalar_select %p246, %s245, 47
      %s248 = smul.addr %s247, 4
      %s249 = scalar_lea.vmem %s0, %s248
      %p250 = pneg %p40
      %p251 = pneg %p37
      %p252 = pneg %p61
      %p253 = pneg %p58
      %p254 = pneg %p82
      %p255 = pneg %p79
      %p256 = pneg %p103
      %p257 = pneg %p100
      %p258 = pneg %p124
      %p259 = pneg %p121
      %p260 = pneg %p145
      %p261 = pneg %p142
      %p262 = pneg %p166
      %p263 = pneg %p163
      %p264 = pneg %p192
      %p265 = pneg %p189
      %s266 = smul.u32 16, %s19
      %p267 = scmp.lt.s32.totalorder %s266, 47
      %s268 = scalar_select %p267, %s266, 47
      %s269 = smul.addr %s268, 8
      %s270 = scalar_lea.vmem %s7, %s269
      %s271 = smul.u32 16, %s19
      %p272 = scmp.lt.s32.totalorder %s271, 47
      %s273 = scalar_select %p272, %s271, 47
      %s274 = smul.addr %s273, 4
      %s275 = scalar_lea.vmem %s0, %s274
      %s276 = smul.u32 16, %s19
      %s277 = smul.u32 16, %s19
      %p278 = scmp.lt.s32.totalorder %s277, 47
      %s279 = scalar_select %p278, %s277, 47
      %s280 = smul.addr %s279, 8
      %s281 = scalar_lea.vmem %s7, %s280
      %s282 = smul.u32 16, %s19
      %v284 = vld [vmem:[%s275] sm:$0xf]
      %v285 = vld [vmem:[%s275 + $0x4] sm:$0xf]
      %v286 = vld [vmem:[%s275 + $0x8] sm:$0xf]
      %v287 = vld [vmem:[%s275 + $0xc] sm:$0xf]
      %v288 = vld [vmem:[%s275 + $0x10] sm:$0xf]
      %v289 = vld [vmem:[%s275 + $0x14] sm:$0xf]
      %v290 = vld [vmem:[%s275 + $0x18] sm:$0xf]
      %v291 = vld [vmem:[%s275 + $0x1c] sm:$0xf]
      %v292 = vld [vmem:[%s275 + $0x20] sm:$0xf]
      %v293 = vld [vmem:[%s275 + $0x24] sm:$0xf]
      %v294 = vld [vmem:[%s275 + $0x28] sm:$0xf]
      %v295 = vld [vmem:[%s275 + $0x2c] sm:$0xf]
      %v296 = vld [vmem:[%s275 + $0x30] sm:$0xf]
      %v297 = vld [vmem:[%s275 + $0x34] sm:$0xf]
      %v298 = vld [vmem:[%s275 + $0x38] sm:$0xf]
      %v299 = vld [vmem:[%s275 + $0x3c] sm:$0xf]
      %v300 = vld [vmem:[%s1] sm:$0xf]
      %v301 = vld [vmem:[%s1 + $0x4] sm:$0xf]
      %v302 = vld [vmem:[%s1 + $0x8] sm:$0xf]
      %v303 = vld [vmem:[%s1 + $0xc] sm:$0xf]
      %v304 = vld [vmem:[%s1 + $0x10] sm:$0xf]
      %v305 = vld [vmem:[%s1 + $0x14] sm:$0xf]
      %v306 = vld [vmem:[%s1 + $0x18] sm:$0xf]
      %v307 = vld [vmem:[%s1 + $0x1c] sm:$0xf]
      %v308 = vld [vmem:[%s2] sm:$0x1]
      %v310 = vlaneseq
      %v311 = vshrl.u32 %v310, 7
      %v312 = vsub.s32 0, %v311
      %v313 = vrot.slane %v308, %v312
      %v331 = vunpack.c.l.b16 %v284
      %v332 = vunpack.c.l.b16 %v285
      %v333 = vunpack.c.l.b16 %v286
      %v334 = vunpack.c.l.b16 %v287
      %v335 = vunpack.c.l.b16 %v288
      %v336 = vunpack.c.l.b16 %v289
      %v337 = vunpack.c.l.b16 %v290
      %v338 = vunpack.c.l.b16 %v291
      %v339 = vunpack.c.l.b16 %v292
      %v340 = vunpack.c.l.b16 %v293
      %v341 = vunpack.c.l.b16 %v294
      %v342 = vunpack.c.l.b16 %v295
      %v343 = vunpack.c.l.b16 %v296
      %v344 = vunpack.c.l.b16 %v297
      %v345 = vunpack.c.l.b16 %v298
      %v346 = vunpack.c.l.b16 %v299
      %v347 = vpack.c.b16 %v332, %v331
      %v348 = vpack.c.b16 %v334, %v333
      %v349 = vpack.c.b16 %v336, %v335
      %v350 = vpack.c.b16 %v338, %v337
      %v351 = vpack.c.b16 %v340, %v339
      %v352 = vpack.c.b16 %v342, %v341
      %v353 = vpack.c.b16 %v344, %v343
      %v354 = vpack.c.b16 %v346, %v345
      %v363 = vunpack.c.l.b16 %v300
      %v364 = vunpack.c.l.b16 %v301
      %v365 = vunpack.c.l.b16 %v302
      %v366 = vunpack.c.l.b16 %v303
      %v367 = vunpack.c.l.b16 %v304
      %v368 = vunpack.c.l.b16 %v305
      %v369 = vunpack.c.l.b16 %v306
      %v370 = vunpack.c.l.b16 %v307
      %v371 = vpack.c.b16 %v364, %v363
      %v372 = vpack.c.b16 %v366, %v365
      %v373 = vpack.c.b16 %v368, %v367
      %v374 = vpack.c.b16 %v370, %v369
      %vm379 = vcmask 523264
      %v381 = vsel %vm379, %v347, 0
      %v384 = vsel %vm379, %v348, 0
      %v387 = vsel %vm379, %v349, 0
      %v390 = vsel %vm379, %v350, 0
      %v393 = vsel %vm379, %v351, 0
      %v396 = vsel %vm379, %v352, 0
      %v399 = vsel %vm379, %v353, 0
      %v402 = vsel %vm379, %v354, 0
      %404 = vmatprep.subr.bf16.mxu0 0
      %405 = vmatpush1.bf16.msra.mxu0 0
      %406 = vmatprep.subr.bf16.mxu0 0
      %407 = vmatpush1.bf16.msra.mxu0 0
      %408 = vmatprep.subr.bf16.mxu0 0
      %409 = vmatpush1.bf16.msra.mxu0 0
      %410 = vmatprep.subr.bf16.mxu0 0
      %411 = vmatpush1.bf16.msra.mxu0 0
      %412 = vmatprep.subr.bf16.mxu0 0
      %413 = vmatpush1.bf16.msra.mxu0 %v374
      %414 = vmatprep.subr.bf16.mxu0 0
      %415 = vmatpush1.bf16.msra.mxu0 %v373
      %416 = vmatprep.subr.bf16.mxu0 0
      %417 = vmatpush1.bf16.msra.mxu0 %v372
      %418 = vmatprep.subr.bf16.mxu0 0
      %419 = vmatpush1.bf16.msra.mxu0 %v371
      %420 = vmatprep.subr.bf16.mxu0 0
      %421 = vmatpush2.bf16.msra.mxu0 0
      %422 = vmatprep.subr.bf16.mxu0 0
      %423 = vmatpush2.bf16.msra.mxu0 0
      %424 = vmatprep.subr.bf16.mxu0 0
      %425 = vmatpush2.bf16.msra.mxu0 0
      %426 = vmatprep.subr.bf16.mxu0 0
      %427 = vmatpush2.bf16.msra.mxu0 0
      %428 = vmatprep.subr.bf16.mxu0 0
      %429 = vmatpush2.bf16.msra.mxu0 0
      %430 = vmatprep.subr.bf16.mxu0 0
      %431 = vmatpush2.bf16.msra.mxu0 0
      %432 = vmatprep.subr.bf16.mxu0 0
      %433 = vmatpush2.bf16.msra.mxu0 0
      %434 = vmatprep.subr.bf16.mxu0 0
      %435 = vmatpush2.bf16.msra.mxu0 0
      %436 = vmatprep.mubr.bf16.mxu0 0
      %437 = vmatmul.mubr.bf16.gmra.mxu0 %v381
      %v438 = vpop.f32.mrf.mxu0
      %v439 = vadd.f32 %v313, %v438
      %v440 = vpop.f32.mrf.mxu0
      %v441 = vpop.f32.mrf.mxu0
      %v442 = vadd.f32 %v313, %v441
      %v443 = vpop.f32.mrf.mxu0
      %444 = vmatprep.mubr.bf16.mxu0 0
      %445 = vmatmul.mubr.bf16.gmra.mxu0 %v384
      %v446 = vpop.f32.mrf.mxu0
      %v447 = vadd.f32 %v313, %v446
      %v448 = vpop.f32.mrf.mxu0
      %v449 = vpop.f32.mrf.mxu0
      %v450 = vadd.f32 %v313, %v449
      %v451 = vpop.f32.mrf.mxu0
      %452 = vmatprep.mubr.bf16.mxu0 0
      %453 = vmatmul.mubr.bf16.gmra.mxu0 %v387
      %v454 = vpop.f32.mrf.mxu0
      %v455 = vadd.f32 %v313, %v454
      %v456 = vpop.f32.mrf.mxu0
      %v457 = vpop.f32.mrf.mxu0
      %v458 = vadd.f32 %v313, %v457
      %v459 = vpop.f32.mrf.mxu0
      %460 = vmatprep.mubr.bf16.mxu0 0
      %461 = vmatmul.mubr.bf16.gmra.mxu0 %v390
      %v462 = vpop.f32.mrf.mxu0
      %v463 = vadd.f32 %v313, %v462
      %v464 = vpop.f32.mrf.mxu0
      %v465 = vpop.f32.mrf.mxu0
      %v466 = vadd.f32 %v313, %v465
      %v467 = vpop.f32.mrf.mxu0
      %468 = vmatprep.mubr.bf16.mxu0 0
      %469 = vmatmul.mubr.bf16.gmra.mxu0 %v393
      %v470 = vpop.f32.mrf.mxu0
      %v471 = vadd.f32 %v313, %v470
      %v472 = vpop.f32.mrf.mxu0
      %v473 = vpop.f32.mrf.mxu0
      %v474 = vadd.f32 %v313, %v473
      %v475 = vpop.f32.mrf.mxu0
      %476 = vmatprep.mubr.bf16.mxu0 0
      %477 = vmatmul.mubr.bf16.gmra.mxu0 %v396
      %v478 = vpop.f32.mrf.mxu0
      %v479 = vadd.f32 %v313, %v478
      %v480 = vpop.f32.mrf.mxu0
      %v481 = vpop.f32.mrf.mxu0
      %v482 = vadd.f32 %v313, %v481
      %v483 = vpop.f32.mrf.mxu0
      %484 = vmatprep.mubr.bf16.mxu0 0
      %485 = vmatmul.mubr.bf16.gmra.mxu0 %v399
      %v486 = vpop.f32.mrf.mxu0
      %v487 = vadd.f32 %v313, %v486
      %v488 = vpop.f32.mrf.mxu0
      %v489 = vpop.f32.mrf.mxu0
      %v490 = vadd.f32 %v313, %v489
      %v491 = vpop.f32.mrf.mxu0
      %492 = vmatprep.mubr.bf16.mxu0 0
      %493 = vmatmul.mubr.bf16.gmra.mxu0 %v402
      %v494 = vpop.f32.mrf.mxu0
      %v495 = vadd.f32 %v313, %v494
      %v496 = vpop.f32.mrf.mxu0
      %v497 = vpop.f32.mrf.mxu0
      %v498 = vadd.f32 %v313, %v497
      %v499 = vpop.f32.mrf.mxu0
      %500 = vdwg.mxu0
      %v501 = vmax.f32 %v439, 0.0
      %v502 = vmax.f32 %v442, 0.0
      %v503 = vmax.f32 %v447, 0.0
      %v504 = vmax.f32 %v450, 0.0
      %v505 = vmax.f32 %v455, 0.0
      %v506 = vmax.f32 %v458, 0.0
      %v507 = vmax.f32 %v463, 0.0
      %v508 = vmax.f32 %v466, 0.0
      %v509 = vmax.f32 %v471, 0.0
      %v510 = vmax.f32 %v474, 0.0
      %v511 = vmax.f32 %v479, 0.0
      %v512 = vmax.f32 %v482, 0.0
      %v513 = vmax.f32 %v487, 0.0
      %v514 = vmax.f32 %v490, 0.0
      %v515 = vmax.f32 %v495, 0.0
      %v516 = vmax.f32 %v498, 0.0
      %v517 = vpack.c.bf16 %v502, %v501
      %v518 = vpack.c.bf16 %v504, %v503
      %v519 = vpack.c.bf16 %v506, %v505
      %v520 = vpack.c.bf16 %v508, %v507
      %v521 = vpack.c.bf16 %v510, %v509
      %v522 = vpack.c.bf16 %v512, %v511
      %v523 = vpack.c.bf16 %v514, %v513
      %v524 = vpack.c.bf16 %v516, %v515
      %v525 = vld [vmem:[%s3] sm:$0xf]
      %v526 = vld [vmem:[%s3 + $0x4] sm:$0xf]
      %v527 = vld [vmem:[%s3 + $0x8] sm:$0xf]
      %v528 = vld [vmem:[%s3 + $0xc] sm:$0xf]
      %v529 = vld [vmem:[%s3 + $0x10] sm:$0xf]
      %v530 = vld [vmem:[%s3 + $0x14] sm:$0xf]
      %v531 = vld [vmem:[%s3 + $0x18] sm:$0xf]
      %v532 = vld [vmem:[%s3 + $0x1c] sm:$0xf]
      %v533 = vld [vmem:[%s3 + $0x20] sm:$0xf]
      %v534 = vld [vmem:[%s3 + $0x24] sm:$0xf]
      %v535 = vld [vmem:[%s3 + $0x28] sm:$0xf]
      %v536 = vld [vmem:[%s3 + $0x2c] sm:$0xf]
      %v537 = vld [vmem:[%s3 + $0x30] sm:$0xf]
      %v538 = vld [vmem:[%s3 + $0x34] sm:$0xf]
      %v539 = vld [vmem:[%s3 + $0x38] sm:$0xf]
      %v540 = vld [vmem:[%s3 + $0x3c] sm:$0xf]
      %v541 = vld [vmem:[%s4] sm:$0x1]
      %v543 = vlaneseq
      %v544 = vshrl.u32 %v543, 7
      %v545 = vsub.s32 0, %v544
      %v546 = vrot.slane %v541, %v545
      %v564 = vunpack.c.l.b16 %v525
      %v565 = vunpack.c.l.b16 %v526
      %v566 = vunpack.c.l.b16 %v527
      %v567 = vunpack.c.l.b16 %v528
      %v568 = vunpack.c.l.b16 %v529
      %v569 = vunpack.c.l.b16 %v530
      %v570 = vunpack.c.l.b16 %v531
      %v571 = vunpack.c.l.b16 %v532
      %v572 = vunpack.c.l.b16 %v533
      %v573 = vunpack.c.l.b16 %v534
      %v574 = vunpack.c.l.b16 %v535
      %v575 = vunpack.c.l.b16 %v536
      %v576 = vunpack.c.l.b16 %v537
      %v577 = vunpack.c.l.b16 %v538
      %v578 = vunpack.c.l.b16 %v539
      %v579 = vunpack.c.l.b16 %v540
      %v580 = vpack.c.b16 %v565, %v564
      %v581 = vpack.c.b16 %v567, %v566
      %v582 = vpack.c.b16 %v569, %v568
      %v583 = vpack.c.b16 %v571, %v570
      %v584 = vpack.c.b16 %v573, %v572
      %v585 = vpack.c.b16 %v575, %v574
      %v586 = vpack.c.b16 %v577, %v576
      %v587 = vpack.c.b16 %v579, %v578
      %596 = vmatprep.subr.bf16.mxu0 0
      %597 = vmatpush1.bf16.msra.mxu0 %v587
      %598 = vmatprep.subr.bf16.mxu0 0
      %599 = vmatpush1.bf16.msra.mxu0 %v586
      %600 = vmatprep.subr.bf16.mxu0 0
      %601 = vmatpush1.bf16.msra.mxu0 %v585
      %602 = vmatprep.subr.bf16.mxu0 0
      %603 = vmatpush1.bf16.msra.mxu0 %v584
      %604 = vmatprep.subr.bf16.mxu0 0
      %605 = vmatpush1.bf16.msra.mxu0 %v583
      %606 = vmatprep.subr.bf16.mxu0 0
      %607 = vmatpush1.bf16.msra.mxu0 %v582
      %608 = vmatprep.subr.bf16.mxu0 0
      %609 = vmatpush1.bf16.msra.mxu0 %v581
      %610 = vmatprep.subr.bf16.mxu0 0
      %611 = vmatpush1.bf16.msra.mxu0 %v580
      %612 = vmatprep.subr.bf16.mxu0 0
      %613 = vmatpush2.bf16.msra.mxu0 0
      %614 = vmatprep.subr.bf16.mxu0 0
      %615 = vmatpush2.bf16.msra.mxu0 0
      %616 = vmatprep.subr.bf16.mxu0 0
      %617 = vmatpush2.bf16.msra.mxu0 0
      %618 = vmatprep.subr.bf16.mxu0 0
      %619 = vmatpush2.bf16.msra.mxu0 0
      %620 = vmatprep.subr.bf16.mxu0 0
      %621 = vmatpush2.bf16.msra.mxu0 0
      %622 = vmatprep.subr.bf16.mxu0 0
      %623 = vmatpush2.bf16.msra.mxu0 0
      %624 = vmatprep.subr.bf16.mxu0 0
      %625 = vmatpush2.bf16.msra.mxu0 0
      %626 = vmatprep.subr.bf16.mxu0 0
      %627 = vmatpush2.bf16.msra.mxu0 0
      %628 = vmatprep.mubr.bf16.mxu0 0
      %629 = vmatmul.mubr.bf16.gmra.mxu0 %v517
      %v630 = vpop.f32.mrf.mxu0
      %v631 = vadd.f32 %v546, %v630
      %v632 = vpop.f32.mrf.mxu0
      %v633 = vpop.f32.mrf.mxu0
      %v634 = vadd.f32 %v546, %v633
      %v635 = vpop.f32.mrf.mxu0
      %636 = vmatprep.mubr.bf16.mxu0 0
      %637 = vmatmul.mubr.bf16.gmra.mxu0 %v518
      %v638 = vpop.f32.mrf.mxu0
      %v639 = vadd.f32 %v546, %v638
      %v640 = vpop.f32.mrf.mxu0
      %v641 = vpop.f32.mrf.mxu0
      %v642 = vadd.f32 %v546, %v641
      %v643 = vpop.f32.mrf.mxu0
      %644 = vmatprep.mubr.bf16.mxu0 0
      %645 = vmatmul.mubr.bf16.gmra.mxu0 %v519
      %v646 = vpop.f32.mrf.mxu0
      %v647 = vadd.f32 %v546, %v646
      %v648 = vpop.f32.mrf.mxu0
      %v649 = vpop.f32.mrf.mxu0
      %v650 = vadd.f32 %v546, %v649
      %v651 = vpop.f32.mrf.mxu0
      %652 = vmatprep.mubr.bf16.mxu0 0
      %653 = vmatmul.mubr.bf16.gmra.mxu0 %v520
      %v654 = vpop.f32.mrf.mxu0
      %v655 = vadd.f32 %v546, %v654
      %v656 = vpop.f32.mrf.mxu0
      %v657 = vpop.f32.mrf.mxu0
      %v658 = vadd.f32 %v546, %v657
      %v659 = vpop.f32.mrf.mxu0
      %660 = vmatprep.mubr.bf16.mxu0 0
      %661 = vmatmul.mubr.bf16.gmra.mxu0 %v521
      %v662 = vpop.f32.mrf.mxu0
      %v663 = vadd.f32 %v546, %v662
      %v664 = vpop.f32.mrf.mxu0
      %v665 = vpop.f32.mrf.mxu0
      %v666 = vadd.f32 %v546, %v665
      %v667 = vpop.f32.mrf.mxu0
      %668 = vmatprep.mubr.bf16.mxu0 0
      %669 = vmatmul.mubr.bf16.gmra.mxu0 %v522
      %v670 = vpop.f32.mrf.mxu0
      %v671 = vadd.f32 %v546, %v670
      %v672 = vpop.f32.mrf.mxu0
      %v673 = vpop.f32.mrf.mxu0
      %v674 = vadd.f32 %v546, %v673
      %v675 = vpop.f32.mrf.mxu0
      %676 = vmatprep.mubr.bf16.mxu0 0
      %677 = vmatmul.mubr.bf16.gmra.mxu0 %v523
      %v678 = vpop.f32.mrf.mxu0
      %v679 = vadd.f32 %v546, %v678
      %v680 = vpop.f32.mrf.mxu0
      %v681 = vpop.f32.mrf.mxu0
      %v682 = vadd.f32 %v546, %v681
      %v683 = vpop.f32.mrf.mxu0
      %684 = vmatprep.mubr.bf16.mxu0 0
      %685 = vmatmul.mubr.bf16.gmra.mxu0 %v524
      %v686 = vpop.f32.mrf.mxu0
      %v687 = vadd.f32 %v546, %v686
      %v688 = vpop.f32.mrf.mxu0
      %v689 = vpop.f32.mrf.mxu0
      %v690 = vadd.f32 %v546, %v689
      %v691 = vpop.f32.mrf.mxu0
      %692 = vdwg.mxu0
      %v693 = vmax.f32 %v631, 0.0
      %v694 = vmax.f32 %v634, 0.0
      %v695 = vmax.f32 %v639, 0.0
      %v696 = vmax.f32 %v642, 0.0
      %v697 = vmax.f32 %v647, 0.0
      %v698 = vmax.f32 %v650, 0.0
      %v699 = vmax.f32 %v655, 0.0
      %v700 = vmax.f32 %v658, 0.0
      %v701 = vmax.f32 %v663, 0.0
      %v702 = vmax.f32 %v666, 0.0
      %v703 = vmax.f32 %v671, 0.0
      %v704 = vmax.f32 %v674, 0.0
      %v705 = vmax.f32 %v679, 0.0
      %v706 = vmax.f32 %v682, 0.0
      %v707 = vmax.f32 %v687, 0.0
      %v708 = vmax.f32 %v690, 0.0
      %v709 = vld [vmem:[%s5] sm:$0x1]
      %v710 = vunpack.c.l.bf16 %v709
      %v711 = vlaneseq
      %v712 = vshrl.u32 %v711, 7
      %v713 = vsub.s32 0, %v712
      %v714 = vrot.slane %v710, %v713
      %v715 = vmul.f32 %v693, %v714
      %v716 = vmul.f32 %v694, %v714
      %v717 = vmul.f32 %v695, %v714
      %v718 = vmul.f32 %v696, %v714
      %v719 = vmul.f32 %v697, %v714
      %v720 = vmul.f32 %v698, %v714
      %v721 = vmul.f32 %v699, %v714
      %v722 = vmul.f32 %v700, %v714
      %v723 = vmul.f32 %v701, %v714
      %v724 = vmul.f32 %v702, %v714
      %v725 = vmul.f32 %v703, %v714
      %v726 = vmul.f32 %v704, %v714
      %v727 = vmul.f32 %v705, %v714
      %v728 = vmul.f32 %v706, %v714
      %v729 = vmul.f32 %v707, %v714
      %v730 = vmul.f32 %v708, %v714
      %v731 = vsel %vm379, %v715, 0.0
      %732 = vadd.xlane.f32.xlu0 %v731
      %v733 = vpop.xlane.xlu0 %732
      %v734 = vsel %vm379, %v716, 0.0
      %735 = vadd.xlane.f32.xlu0 %v734
      %v736 = vpop.xlane.xlu0 %735
      %v737 = vsel %vm379, %v717, 0.0
      %738 = vadd.xlane.f32.xlu0 %v737
      %v739 = vpop.xlane.xlu0 %738
      %v740 = vsel %vm379, %v718, 0.0
      %741 = vadd.xlane.f32.xlu0 %v740
      %v742 = vpop.xlane.xlu0 %741
      %v743 = vsel %vm379, %v719, 0.0
      %744 = vadd.xlane.f32.xlu0 %v743
      %v745 = vpop.xlane.xlu0 %744
      %v746 = vsel %vm379, %v720, 0.0
      %747 = vadd.xlane.f32.xlu0 %v746
      %v748 = vpop.xlane.xlu0 %747
      %v749 = vsel %vm379, %v721, 0.0
      %750 = vadd.xlane.f32.xlu0 %v749
      %v751 = vpop.xlane.xlu0 %750
      %v752 = vsel %vm379, %v722, 0.0
      %753 = vadd.xlane.f32.xlu0 %v752
      %v754 = vpop.xlane.xlu0 %753
      %v755 = vsel %vm379, %v723, 0.0
      %756 = vadd.xlane.f32.xlu0 %v755
      %v757 = vpop.xlane.xlu0 %756
      %v758 = vsel %vm379, %v724, 0.0
      %759 = vadd.xlane.f32.xlu0 %v758
      %v760 = vpop.xlane.xlu0 %759
      %v761 = vsel %vm379, %v725, 0.0
      %762 = vadd.xlane.f32.xlu0 %v761
      %v763 = vpop.xlane.xlu0 %762
      %v764 = vsel %vm379, %v726, 0.0
      %765 = vadd.xlane.f32.xlu0 %v764
      %v766 = vpop.xlane.xlu0 %765
      %v767 = vsel %vm379, %v727, 0.0
      %768 = vadd.xlane.f32.xlu0 %v767
      %v769 = vpop.xlane.xlu0 %768
      %v770 = vsel %vm379, %v728, 0.0
      %771 = vadd.xlane.f32.xlu0 %v770
      %v772 = vpop.xlane.xlu0 %771
      %v773 = vsel %vm379, %v729, 0.0
      %774 = vadd.xlane.f32.xlu0 %v773
      %v775 = vpop.xlane.xlu0 %774
      %v776 = vsel %vm379, %v730, 0.0
      %777 = vadd.xlane.f32.xlu0 %v776
      %v778 = vpop.xlane.xlu0 %777
      %s779 = sld [smem:[#allocation2]]
      %v780 = vstv %s779
      %v781 = vadd.f32 %v733, %v780
      %v782 = vadd.f32 %v736, %v780
      %v783 = vadd.f32 %v739, %v780
      %v784 = vadd.f32 %v742, %v780
      %v785 = vadd.f32 %v745, %v780
      %v786 = vadd.f32 %v748, %v780
      %v787 = vadd.f32 %v751, %v780
      %v788 = vadd.f32 %v754, %v780
      %v789 = vadd.f32 %v757, %v780
      %v790 = vadd.f32 %v760, %v780
      %v791 = vadd.f32 %v763, %v780
      %v792 = vadd.f32 %v766, %v780
      %v793 = vadd.f32 %v769, %v780
      %v794 = vadd.f32 %v772, %v780
      %v795 = vadd.f32 %v775, %v780
      %v796 = vadd.f32 %v778, %v780
      %vm797 = vcmask 7168
      %798 = vst.msk [vmem:[%s281] sm:$0xff] %vm797, %v781
      %799 = vst.msk [vmem:[%s281 + $0x8] sm:$0xff] %vm797, %v782
      %800 = vst.msk [vmem:[%s281 + $0x10] sm:$0xff] %vm797, %v783
      %801 = vst.msk [vmem:[%s281 + $0x18] sm:$0xff] %vm797, %v784
      %802 = vst.msk [vmem:[%s281 + $0x20] sm:$0xff] %vm797, %v785
      %803 = vst.msk [vmem:[%s281 + $0x28] sm:$0xff] %vm797, %v786
      %804 = vst.msk [vmem:[%s281 + $0x30] sm:$0xff] %vm797, %v787
      %805 = vst.msk [vmem:[%s281 + $0x38] sm:$0xff] %vm797, %v788
      %806 = vst.msk [vmem:[%s281 + $0x40] sm:$0xff] %vm797, %v789
      %807 = vst.msk [vmem:[%s281 + $0x48] sm:$0xff] %vm797, %v790
      %808 = vst.msk [vmem:[%s281 + $0x50] sm:$0xff] %vm797, %v791
      %809 = vst.msk [vmem:[%s281 + $0x58] sm:$0xff] %vm797, %v792
      %810 = vst.msk [vmem:[%s281 + $0x60] sm:$0xff] %vm797, %v793
      %811 = vst.msk [vmem:[%s281 + $0x68] sm:$0xff] %vm797, %v794
      %812 = vst.msk [vmem:[%s281 + $0x70] sm:$0xff] %vm797, %v795
      %813 = vst.msk [vmem:[%s281 + $0x78] sm:$0xff] %vm797, %v796
      %s814 = smul.u32 16, %s19
      %p815 = scmp.lt.s32.totalorder %s814, 47
      %s816 = scalar_select %p815, %s814, 47
      %s817 = smul.addr %s816, 8
      %s818 = scalar_lea.vmem %s7, %s817
      // Predicated region
      $region49: #{tpu_custom_call.1} parent=47 // pred_check
        %p819 = pneg %p189
      $region50: #{tpu_custom_call.1} parent=47 // pred_check_branch
        %821 = sbr.rel (%p819) target = $region52
      $region51: #{tpu_custom_call.1} parent=47 // pred_region
        %s822 = smul.u32 16, %s19
      $region52: #{tpu_custom_call.1} parent=47 // pred_fallthru
        _
    $region48: #{tpu_custom_call.1} parent=5 // pred_fallthru
      _
    %p823 = scmp.le.s32.totalorder 2, %s14
    // Predicated region
    $region53: #{tpu_custom_call.1} parent=5 // pred_check
      %p824 = pneg %p823
    $region54: #{tpu_custom_call.1} parent=5 // pred_check_branch
      %826 = sbr.rel (%p824) target = $region56
    $region55: #{tpu_custom_call.1} parent=5 // pred_region
      %s827 = ssub.s32 %s14, 2
      // Predicated region
      $region57: #{tpu_custom_call.1} parent=55 // pred_check
        %p828 = pneg %p195
      $region58: #{tpu_custom_call.1} parent=55 // pred_check_branch
        %830 = sbr.rel (%p828) target = $region60
      $region59: #{tpu_custom_call.1} parent=55 // pred_region
        %s831 = smul.u32 16, %s20
        %p832 = scmp.lt.s32.totalorder %s831, 47
        %s833 = scalar_select %p832, %s831, 47
        %s834 = smul.addr %s833, 8
        %s835 = scalar_lea.vmem %s7, %s834
      $region60: #{tpu_custom_call.1} parent=55 // pred_fallthru
        _
    $region56: #{tpu_custom_call.1} parent=5 // pred_fallthru
      _
  $region6: #{tpu_custom_call.1} parent=0 // loop_footer
    %s18 = sadd.s32 1, %s14
  $region7: #{tpu_custom_call.1} parent=0 // loop_footer_branch
    %13 = sbr.rel target = $region3
  $region8: #{tpu_custom_call.1} parent=0 // loop_exit
    _

</llo_original>
